<compile_context>
chip_gen: v6e
topology: v6e:2x2x1
jax: 0.10.0
libtpu: 0.0.40
codegen_flags: <defaults>
</compile_context>

<pallas_src>
import functools
import math

import jax
import jax.numpy as jnp
from jax.experimental import pallas as pl
from jax.experimental.pallas import tpu as pltpu

EPS = 1e-6
PREC = jax.lax.Precision.HIGHEST


# ---------------------------------------------------------------------------
# Generation-aware VMEM budget
# ---------------------------------------------------------------------------
@functools.lru_cache(maxsize=1)
def _vmem_budget_bytes():
    cap = 64 << 20  # conservative fallback (v7x physical)
    try:
        info = pltpu.get_tpu_info()
        v = getattr(info, "vmem_capacity_bytes", None)
        if v:
            cap = int(v)
    except Exception:
        pass
    # ~3/4 of physical: 96 MiB on 128 MiB parts (v5e/v6e), 48 MiB on v7x.
    return int(max(32 << 20, (cap * 3) // 4))


def _row_tile_clamp(t):
    return max(0, min(512, (int(t) // 8) * 8))


# ---------------------------------------------------------------------------
# Fused LayerNorm + matmul (LN1 -> QKV projection, LN2 -> FFN1)
#   LayerNorm matches the custom PyTorch module: unbiased std, eps added to std.
# ---------------------------------------------------------------------------
def _pick_ln_mm_tiles(rows, d, n, itemsize, budget):
    """Prefer a full-N tile so the whole weight stays resident in VMEM; fall back
    to 512-wide N tiles when that would starve the row tile."""

    def row_tile(tn):
        fixed = 2 * d * tn * itemsize + 2 * tn * itemsize            # weight + bias
        per_row = 2 * d * itemsize + 4 * d + 2 * tn * itemsize       # x + LN scratch + out
        return _row_tile_clamp((budget - fixed) // max(per_row, 1))

    tn = n
    tm = row_tile(tn)
    if tm < min(64, rows) and n > 512:
        tn = 512 if (n % 512 == 0 or n > 1024) else n
        tm = row_tile(tn)
    tm = max(8, tm)
    if rows <= tm:
        tm = rows
    return tm, tn


def fused_ln_linear(x2, alpha, beta, w, *, bias=None, relu=False, split_parts=None):
    """out = [alpha * (x - mean) / (std + eps) + beta] @ w  [+ bias] [ReLU]

    x2: (rows, d); w: (d, n).  The LayerNorm is computed once per (tm, d) row tile
    inside the matmul prologue and cached in a VMEM scratch across the N tiles.

    split_parts=k writes the output as (k, rows, n // k) purely via the output
    BlockSpec (used to hand Q|K|V to the attention kernel with zero transposes).
    """
    rows, d = x2.shape
    d2, n = w.shape
    assert d == d2
    itemsize = int(x2.dtype.itemsize)
    budget = _vmem_budget_bytes()
    tm, tn = _pick_ln_mm_tiles(rows, d, n, itemsize, budget)

    dp = None
    if split_parts is not None:
        assert n % split_parts == 0
        dp = n // split_parts
        # every output tile must land inside exactly one part (or cover all parts)
        if tn != n and (dp % tn != 0 or tn % 128 != 0):
            tn = n

    grid = (pl.cdiv(rows, tm), pl.cdiv(n, tn))
    has_bias = bias is not None
    inv_dof = 1.0 / float(d - 1)  # torch.std default: unbiased (ddof=1)

    inputs = [x2, alpha.reshape(1, d), beta.reshape(1, d), w]
    in_specs = [
        pl.BlockSpec((tm, d), lambda i, j: (i, 0)),
        pl.BlockSpec((1, d), lambda i, j: (0, 0)),
        pl.BlockSpec((1, d), lambda i, j: (0, 0)),
        pl.BlockSpec((d, tn), lambda i, j: (0, j)),
    ]
    if has_bias:
        inputs.append(bias.reshape(1, n))
        in_specs.append(pl.BlockSpec((1, tn), lambda i, j: (0, j)))

    if split_parts is None:
        out_shape = jax.ShapeDtypeStruct((rows, n), x2.dtype)
        out_spec = pl.BlockSpec((tm, tn), lambda i, j: (i, j))
    elif tn == n:
        out_shape = jax.ShapeDtypeStruct((split_parts, rows, dp), x2.dtype)
        out_spec = pl.BlockSpec((split_parts, tm, dp), lambda i, j: (0, i, 0))
    else:
        cpb = dp // tn  # column blocks per part
        out_shape = jax.ShapeDtypeStruct((split_parts, rows, dp), x2.dtype)
        out_spec = pl.BlockSpec((1, tm, tn), lambda i, j: (j // cpb, i, j % cpb))

    def kernel(*refs):
        x_ref, a_ref, b_ref, w_ref = refs[:4]
        idx = 4
        bias_ref = refs[idx] if has_bias else None
        idx += int(has_bias)
        o_ref = refs[idx]
        norm_ref = refs[idx + 1]

        # Normalize the row tile once (j == 0) and reuse it from VMEM scratch for
        # every N tile of the weight (the x block index is constant across j).
        @pl.when(pl.program_id(1) == 0)
        def _ln():
            xv = x_ref[...].astype(jnp.float32)
            mean = jnp.mean(xv, axis=-1, keepdims=True)
            diff = xv - mean
            var = jnp.sum(diff * diff, axis=-1, keepdims=True) * inv_dof
            inv_std = pl.reciprocal(jnp.sqrt(var) + EPS, approx=False)
            norm_ref[...] = (a_ref[...].astype(jnp.float32) * (diff * inv_std)
                             + b_ref[...].astype(jnp.float32))
            # NOTE: padded tail rows flow through this math on garbage data but are
            # masked at the output store -- benign (no cross-row reduction here).

        # TODO(synk): for a bf16 production path, feed bf16 operands to the MXU; the
        # demo keeps f32 with explicit HIGHEST precision for a tight accuracy check.
        out = jnp.dot(norm_ref[...], w_ref[...].astype(jnp.float32),
                      preferred_element_type=jnp.float32, precision=PREC)
        if has_bias:
            out = out + bias_ref[...].astype(jnp.float32)
        if relu:
            out = jnp.maximum(out, 0.0)

        if split_parts is None:
            o_ref[...] = out.astype(o_ref.dtype)
        elif tn == n:
            for p_ in range(split_parts):
                o_ref[p_] = out[:, p_ * dp:(p_ + 1) * dp].astype(o_ref.dtype)
        else:
            o_ref[0] = out.astype(o_ref.dtype)

    return pl.pallas_call(
        kernel,
        out_shape=out_shape,
        grid_spec=pltpu.PrefetchScalarGridSpec(
            num_scalar_prefetch=0,
            grid=grid,
            in_specs=in_specs,
            out_specs=out_spec,
            scratch_shapes=[pltpu.VMEM((tm, d), jnp.float32)],
        ),
        compiler_params=pltpu.CompilerParams(
            dimension_semantics=("parallel", "arbitrary"),
            vmem_limit_bytes=_vmem_budget_bytes(),
        ),
    )(*inputs)


# ---------------------------------------------------------------------------
# Tiled matmul with fused bias / ReLU / residual epilogue (W_o proj, FFN2)
# ---------------------------------------------------------------------------
def _pick_mm_tiles(m, k, n, itemsize, budget, has_res):
    # K tile must divide K exactly (the f32 accumulator must never see padded K).
    if k <= 2048:
        tk = k
    else:
        tk = next((c for c in (2048, 1024, 512, 256) if k % c == 0), k)

    def row_tile(tn):
        fixed = 2 * tk * tn * itemsize + 2 * tn * itemsize          # weight + bias
        per_row = (2 * tk + (2 + (2 if has_res else 0)) * tn) * itemsize + 4 * tn
        return _row_tile_clamp((budget - fixed) // max(per_row, 1))

    tn = n
    tm = row_tile(tn)
    if tm < min(64, m) and n > 512:
        tn = 512 if (n % 512 == 0 or n > 1024) else n
        tm = row_tile(tn)
    tm = max(8, tm)
    if m <= tm:
        tm = m
    return tm, tn, tk


def linear(a, w, *, bias=None, residual=None, relu=False):
    """out = a @ w [+ bias] [ReLU] [+ residual], fused in one Pallas kernel.

    Both residual adds of the encoder block ride in this epilogue so they never
    cost an extra HBM pass.  When the whole weight fits the VMEM budget the tile
    picker selects tk == K and tn == N, i.e. the weight is fetched exactly once.
    """
    m, k = a.shape
    k2, n = w.shape
    assert k == k2
    itemsize = int(a.dtype.itemsize)
    tm, tn, tk = _pick_mm_tiles(m, k, n, itemsize, _vmem_budget_bytes(),
                                residual is not None)
    grid = (pl.cdiv(m, tm), pl.cdiv(n, tn), pl.cdiv(k, tk))

    has_bias = bias is not None
    has_res = residual is not None

    inputs = [a, w]
    in_specs = [
        pl.BlockSpec((tm, tk), lambda i, j, kk: (i, kk)),
        pl.BlockSpec((tk, tn), lambda i, j, kk: (kk, j)),
    ]
    if has_bias:
        inputs.append(bias.reshape(1, n))
        in_specs.append(pl.BlockSpec((1, tn), lambda i, j, kk: (0, j)))
    if has_res:
        inputs.append(residual)
        in_specs.append(pl.BlockSpec((tm, tn), lambda i, j, kk: (i, j)))

    def kernel(*refs):
        a_ref, w_ref = refs[0], refs[1]
        idx = 2
        bias_ref = refs[idx] if has_bias else None
        idx += int(has_bias)
        res_ref = refs[idx] if has_res else None
        idx += int(has_res)
        o_ref = refs[idx]
        acc_ref = refs[idx + 1]

        @pl.when(pl.program_id(2) == 0)
        def _init():
            acc_ref[...] = jnp.zeros_like(acc_ref)

        acc_ref[...] += jnp.dot(a_ref[...], w_ref[...],
                                preferred_element_type=jnp.float32, precision=PREC)

        @pl.when(pl.program_id(2) == pl.num_programs(2) - 1)
        def _epilogue():
            out = acc_ref[...]
            if has_bias:
                out = out + bias_ref[...].astype(jnp.float32)
            if relu:
                out = jnp.maximum(out, 0.0)
            if has_res:
                out = out + res_ref[...].astype(jnp.float32)
            o_ref[...] = out.astype(o_ref.dtype)

    return pl.pallas_call(
        kernel,
        out_shape=jax.ShapeDtypeStruct((m, n), a.dtype),
        grid_spec=pltpu.PrefetchScalarGridSpec(
            num_scalar_prefetch=0,
            grid=grid,
            in_specs=in_specs,
            out_specs=pl.BlockSpec((tm, tn), lambda i, j, kk: (i, j)),
            scratch_shapes=[pltpu.VMEM((tm, tn), jnp.float32)],
        ),
        compiler_params=pltpu.CompilerParams(
            dimension_semantics=("parallel", "parallel", "arbitrary"),
            vmem_limit_bytes=_vmem_budget_bytes(),
        ),
    )(*inputs)


# ---------------------------------------------------------------------------
# Flash-style multi-head attention: all heads of one batch per grid step,
# KV-tiled online softmax, mask kept in its original compact form.
# ---------------------------------------------------------------------------
def _pick_kv_tile(seq):
    if seq <= 1024:
        return seq
    for t in (512, 256, 128):
        if seq % t == 0:
            return t
    return seq


def multi_head_attention(qkv, mask, *, batch, seq, heads):
    """qkv: (3, batch*seq, d) as written by the fused LN+QKV projection.
    mask: optional (batch, 1, 1, seq) padding mask or (batch, 1, seq, seq).
    Returns (batch, seq, d)."""
    three, bs, d = qkv.shape
    assert three == 3 and bs == batch * seq and d % heads == 0
    assert seq % 8 == 0 or batch == 1, "seq must be a multiple of 8 (sublane tiling)"
    dk = d // heads
    scale = 1.0 / math.sqrt(dk)
    tkv = _pick_kv_tile(seq)
    num_kv = seq // tkv

    has_mask = mask is not None
    inputs = [qkv, qkv, qkv]
    in_specs = [
        pl.BlockSpec((1, seq, d), lambda b, kv: (0, b, 0)),                 # Q slab
        pl.BlockSpec((1, tkv, d), lambda b, kv: (1, b * num_kv + kv, 0)),   # K tile
        pl.BlockSpec((1, tkv, d), lambda b, kv: (2, b * num_kv + kv, 0)),   # V tile
    ]
    if has_mask:
        mq = mask.shape[-2]
        mask3 = jnp.broadcast_to(mask, (batch, 1, mq, seq)).reshape(batch, mq, seq)
        mask3 = mask3.astype(jnp.float32)
        inputs.append(mask3)
        in_specs.append(pl.BlockSpec((1, mq, tkv), lambda b, kv: (b, 0, kv)))

    def kernel(*refs):
        q_ref, k_ref, v_ref = refs[0], refs[1], refs[2]
        idx = 3
        mask_ref = refs[idx] if has_mask else None
        idx += int(has_mask)
        o_ref = refs[idx]
        m_sc, l_sc, acc_sc = refs[idx + 1], refs[idx + 2], refs[idx + 3]

        kv = pl.program_id(1)

        @pl.when(kv == 0)
        def _init():
            m_sc[...] = jnp.full((heads, seq, 1), -1e30, dtype=jnp.float32)
            l_sc[...] = jnp.zeros((heads, seq, 1), dtype=jnp.float32)
            acc_sc[...] = jnp.zeros((heads, seq, dk), dtype=jnp.float32)

        qb = q_ref[0].astype(jnp.float32)           # (seq, d)
        kb = k_ref[0].astype(jnp.float32)           # (tkv, d)
        vb = v_ref[0].astype(jnp.float32)           # (tkv, d)
        mask2 = mask_ref[0] if has_mask else None   # (1 | seq, tkv)

        for hh in range(heads):
            lo, hi = hh * dk, (hh + 1) * dk
            # scores = q_h @ k_h^T (implicit K transpose on the XLU; MXU has slack)
            scores = jax.lax.dot_general(
                qb[:, lo:hi], kb[:, lo:hi], (((1,), (1,)), ((), ())),
                preferred_element_type=jnp.float32, precision=PREC) * scale
            if has_mask:
                # NOTE: the PyTorch source calls masked_fill (non in-place) and drops
                # the result, so the mask is literally a no-op there; we apply it as
                # clearly intended (fill value -1e10).  With the all-ones padding mask
                # used in the demo both semantics agree exactly.
                scores = jnp.where(mask2 == 0, jnp.float32(-1e10), scores)
            m_prev = m_sc[hh]                                           # (seq, 1)
            m_new = jnp.maximum(m_prev, jnp.max(scores, axis=-1, keepdims=True))
            corr = jnp.exp(m_prev - m_new)
            p = jnp.exp(scores - m_new)                                 # probs stay f32
            l_sc[hh] = corr * l_sc[hh] + jnp.sum(p, axis=-1, keepdims=True)
            acc_sc[hh] = corr * acc_sc[hh] + jnp.dot(
                p, vb[:, lo:hi], preferred_element_type=jnp.float32, precision=PREC)
            m_sc[hh] = m_new

        @pl.when(kv == pl.num_programs(1) - 1)
        def _finalize():
            pieces = []
            for hh in range(heads):
                inv_l = pl.reciprocal(l_sc[hh], approx=False)
                pieces.append(acc_sc[hh] * inv_l)
            out = jnp.concatenate(pieces, axis=-1)      # (seq, d) lane-dense slab
            o_ref[0] = out.astype(o_ref.dtype)

    return pl.pallas_call(
        kernel,
        out_shape=jax.ShapeDtypeStruct((batch, seq, d), qkv.dtype),
        grid_spec=pltpu.PrefetchScalarGridSpec(
            num_scalar_prefetch=0,
            grid=(batch, num_kv),
            in_specs=in_specs,
            out_specs=pl.BlockSpec((1, seq, d), lambda b, kv: (b, 0, 0)),
            scratch_shapes=[
                pltpu.VMEM((heads, seq, 1), jnp.float32),   # running max m
                pltpu.VMEM((heads, seq, 1), jnp.float32),   # running sum l
                pltpu.VMEM((heads, seq, dk), jnp.float32),  # output accumulator
            ],
        ),
        compiler_params=pltpu.CompilerParams(
            dimension_semantics=("parallel", "arbitrary"),
            vmem_limit_bytes=_vmem_budget_bytes(),
        ),
    )(*inputs)


# ---------------------------------------------------------------------------
# Full EncoderBlock forward (pre-norm residual connections, dropout = identity)
# ---------------------------------------------------------------------------
def encoder_block_forward(x, params, src_mask=None):
    b, s, d = x.shape
    h = params["num_heads"]
    x_flat = x.reshape(b * s, d)

    # --- sublayer 1: x = x + W_o( MHA( LN1(x) ) ) ---
    # single fused LN + QKV projection; output lands directly in (3, b*s, d)
    w_qkv = jnp.concatenate([params["w_q"], params["w_k"], params["w_v"]], axis=1)
    qkv = fused_ln_linear(x_flat, params["ln1_alpha"], params["ln1_beta"], w_qkv,
                          split_parts=3)

    attn = multi_head_attention(qkv, src_mask, batch=b, seq=s, heads=h)
    # output projection with the first residual add fused into the matmul epilogue
    x1 = linear(attn.reshape(b * s, d), params["w_o"], residual=x_flat)

    # --- sublayer 2: x = x + FFN( LN2(x) ) ---
    ff = fused_ln_linear(x1, params["ln2_alpha"], params["ln2_beta"],
                         params["w_ff1"], bias=params["b_ff1"], relu=True)
    x2 = linear(ff, params["w_ff2"], bias=params["b_ff2"], residual=x1)

    # TODO(synk): dropout (attention probs / residual / FFN) omitted -- eval-mode
    # identity; the stochastic training path is not implemented.
    return x2.reshape(b, s, d)


# ---------------------------------------------------------------------------
# Pure-JAX reference
# ---------------------------------------------------------------------------
def ref_encoder_block(x, params, src_mask=None):
    b, s, d = x.shape
    h = params["num_heads"]
    dk = d // h

    def ln(t, a, bta):
        mean = jnp.mean(t, axis=-1, keepdims=True)
        std = jnp.std(t, axis=-1, keepdims=True, ddof=1)
        return a * (t - mean) / (std + EPS) + bta

    def mm(a_, b_):
        return jnp.matmul(a_, b_, precision=PREC)

    h1 = ln(x, params["ln1_alpha"], params["ln1_beta"])
    q, k, v = mm(h1, params["w_q"]), mm(h1, params["w_k"]), mm(h1, params["w_v"])

    def split(t):
        return t.reshape(b, s, h, dk).transpose(0, 2, 1, 3)

    qh, kh, vh = split(q), split(k), split(v)
    scores = jnp.einsum("bhqd,bhkd->bhqk", qh, kh, precision=PREC) / math.sqrt(dk)
    if src_mask is not None:
        scores = jnp.where(jnp.broadcast_to(src_mask, scores.shape) == 0, -1e10, scores)
    attn_w = jax.nn.softmax(scores, axis=-1)
    attn = jnp.einsum("bhqk,bhkd->bhqd", attn_w, vh, precision=PREC)
    attn = attn.transpose(0, 2, 1, 3).reshape(b, s, d)
    x1 = x + mm(attn, params["w_o"])

    h2 = ln(x1, params["ln2_alpha"], params["ln2_beta"])
    ff = mm(jnp.maximum(mm(h2, params["w_ff1"]) + params["b_ff1"], 0.0),
            params["w_ff2"]) + params["b_ff2"]
    return x1 + ff


if __name__ == "__main__":
    key = jax.random.PRNGKey(0)
    ks = jax.random.split(key, 12)

    B, S, D_MODEL, H, D_FF = 2, 8, 32, 4, 128

    x = jax.random.normal(ks[0], (B, S, D_MODEL), dtype=jnp.float32)
    # padding mask (all ones here): (B, 1, 1, S), broadcasts over heads/queries
    src_mask = jnp.ones((B, 1, 1, S), dtype=jnp.float32)

    def winit(k_, fan_in, shape):
        return jax.random.normal(k_, shape, dtype=jnp.float32) / math.sqrt(fan_in)

    params = {
        "num_heads": H,
        # weights stored as (in, out) == transpose of the nn.Linear (out, in) layout
        "w_q": winit(ks[1], D_MODEL, (D_MODEL, D_MODEL)),
        "w_k": winit(ks[2], D_MODEL, (D_MODEL, D_MODEL)),
        "w_v": winit(ks[3], D_MODEL, (D_MODEL, D_MODEL)),
        "w_o": winit(ks[4], D_MODEL, (D_MODEL, D_MODEL)),
        "w_ff1": winit(ks[5], D_MODEL, (D_MODEL, D_FF)),
        "b_ff1": 0.1 * jax.random.normal(ks[6], (D_FF,), dtype=jnp.float32),
        "w_ff2": winit(ks[7], D_FF, (D_FF, D_MODEL)),
        "b_ff2": 0.1 * jax.random.normal(ks[8], (D_MODEL,), dtype=jnp.float32),
        # LayerNormalization params (module inits ones/zeros; perturbed to exercise them)
        "ln1_alpha": 1.0 + 0.1 * jax.random.normal(ks[9], (D_MODEL,), dtype=jnp.float32),
        "ln1_beta": 0.1 * jax.random.normal(ks[10], (D_MODEL,), dtype=jnp.float32),
        "ln2_alpha": jnp.ones((D_MODEL,), dtype=jnp.float32),
        "ln2_beta": jnp.zeros((D_MODEL,), dtype=jnp.float32),
    }

    out = encoder_block_forward(x, params, src_mask)
    out = jax.block_until_ready(out)

    ref = ref_encoder_block(x, params, src_mask)
    assert out.shape == ref.shape, f"shape mismatch {out.shape} vs {ref.shape}"
    max_err = float(jnp.max(jnp.abs(out - ref)))
    assert jnp.allclose(out, ref, atol=1e-3, rtol=1e-3), (
        f"mismatch vs reference: max abs err = {max_err}")

    print("KERNEL_OK")
</pallas_src>

<mosaic_0001>
module attributes {stable_mosaic.version = 11 : i64} {
  func.func @kernel(%arg0: i32, %arg1: i32, %arg2: memref<16x32xf32, #tpu.memory_space<vmem>>, %arg3: memref<1x32xf32, #tpu.memory_space<vmem>>, %arg4: memref<1x32xf32, #tpu.memory_space<vmem>>, %arg5: memref<32x96xf32, #tpu.memory_space<vmem>>, %arg6: memref<3x16x32xf32, #tpu.memory_space<vmem>>, %arg7: memref<16x32xf32, #tpu.memory_space<vmem>>) attributes {dimension_semantics = [#tpu.dimension_semantics<parallel>, #tpu.dimension_semantics<arbitrary>], iteration_bounds = array<i64: 1, 1>, scalar_prefetch = 0 : i64, scratch_operands = 1 : i64, tpu.core_type = #tpu.core_type<tc>, window_params = [{transform_indices = @transform_0, window_bounds = array<i64: 16, 32>}, {pipeline_mode = #tpu.pipeline_mode<synchronous>, transform_indices = @transform_1, window_bounds = array<i64: 1, 32>}, {pipeline_mode = #tpu.pipeline_mode<synchronous>, transform_indices = @transform_2, window_bounds = array<i64: 1, 32>}, {transform_indices = @transform_3, window_bounds = array<i64: 32, 96>}, {transform_indices = @transform_4, window_bounds = array<i64: 3, 16, 32>}]} {
    %c0_i32 = arith.constant 0 : i32
    %0 = arith.cmpi eq, %arg1, %c0_i32 : i32
    %1 = arith.extui %0 : i1 to i32
    %c0_i32_0 = arith.constant 0 : i32
    %2 = arith.cmpi ne, %1, %c0_i32_0 : i32
    scf.if %2 {
      %c0_11 = arith.constant 0 : index
      %c0_12 = arith.constant 0 : index
      %18 = vector.load %arg2[%c0_11, %c0_12] : memref<16x32xf32, #tpu.memory_space<vmem>>, vector<16x32xf32>
      %cst_13 = arith.constant dense<0.000000e+00> : vector<16xf32>
      %19 = vector.multi_reduction <add>, %18, %cst_13 [1] : vector<16x32xf32> to vector<16xf32>
      %20 = vector.shape_cast %19 : vector<16xf32> to vector<16x1xf32>
      %cst_14 = arith.constant 3.200000e+01 : f32
      %21 = vector.broadcast %cst_14 : f32 to vector<16x1xf32>
      %22 = arith.divf %20, %21 : vector<16x1xf32>
      %23 = vector.broadcast %22 : vector<16x1xf32> to vector<16x32xf32>
      %24 = arith.subf %18, %23 : vector<16x32xf32>
      %25 = arith.mulf %24, %24 : vector<16x32xf32>
      %cst_15 = arith.constant dense<0.000000e+00> : vector<16xf32>
      %26 = vector.multi_reduction <add>, %25, %cst_15 [1] : vector<16x32xf32> to vector<16xf32>
      %27 = vector.shape_cast %26 : vector<16xf32> to vector<16x1xf32>
      %cst_16 = arith.constant 0.0322580636 : f32
      %28 = vector.broadcast %cst_16 : f32 to vector<16x1xf32>
      %29 = arith.mulf %27, %28 : vector<16x1xf32>
      %30 = math.sqrt %29 : vector<16x1xf32>
      %cst_17 = arith.constant 9.99999997E-7 : f32
      %31 = vector.broadcast %cst_17 : f32 to vector<16x1xf32>
      %32 = arith.addf %30, %31 : vector<16x1xf32>
      %33 = tpu.reciprocal %32 : vector<16x1xf32> -> vector<16x1xf32>
      %c0_18 = arith.constant 0 : index
      %c0_19 = arith.constant 0 : index
      %34 = vector.load %arg3[%c0_18, %c0_19] : memref<1x32xf32, #tpu.memory_space<vmem>>, vector<1x32xf32>
      %35 = vector.broadcast %33 : vector<16x1xf32> to vector<16x32xf32>
      %36 = arith.mulf %24, %35 : vector<16x32xf32>
      %37 = vector.broadcast %34 : vector<1x32xf32> to vector<16x32xf32>
      %38 = arith.mulf %37, %36 : vector<16x32xf32>
      %c0_20 = arith.constant 0 : index
      %c0_21 = arith.constant 0 : index
      %39 = vector.load %arg4[%c0_20, %c0_21] : memref<1x32xf32, #tpu.memory_space<vmem>>, vector<1x32xf32>
      %40 = vector.broadcast %39 : vector<1x32xf32> to vector<16x32xf32>
      %41 = arith.addf %38, %40 : vector<16x32xf32>
      %c0_22 = arith.constant 0 : index
      %c0_23 = arith.constant 0 : index
      %42 = vector.load %arg7[%c0_22, %c0_23] : memref<16x32xf32, #tpu.memory_space<vmem>>, vector<16x32xf32>
      tpu.vector_store %arg7[%c0_22, %c0_23], %41 {strides = array<i32>} : memref<16x32xf32, #tpu.memory_space<vmem>>, vector<16x32xf32>,
    } else {
    }
    %c0 = arith.constant 0 : index
    %c0_1 = arith.constant 0 : index
    %3 = vector.load %arg7[%c0, %c0_1] : memref<16x32xf32, #tpu.memory_space<vmem>>, vector<16x32xf32>
    %c0_2 = arith.constant 0 : index
    %c0_3 = arith.constant 0 : index
    %4 = vector.load %arg5[%c0_2, %c0_3] : memref<32x96xf32, #tpu.memory_space<vmem>>, vector<32x96xf32>
    %cst = arith.constant dense<0.000000e+00> : vector<16x96xf32>
    %5 = tpu.matmul %3, %4, %cst {dimension_numbers = #tpu.dot_dimension_numbers<[1], [0], [0], [1], [0, 0, 1, 1], [], []>, precision = #tpu.contract_precision<fp32>} : vector<16x32xf32>, vector<32x96xf32>, vector<16x96xf32> -> vector<16x96xf32>
    %6 = vector.extract_strided_slice %5 {offsets = [0, 0], sizes = [16, 32], strides = [1, 1]} : vector<16x96xf32> to vector<16x32xf32>
    %c0_4 = arith.constant 0 : index
    %c0_5 = arith.constant 0 : index
    %c0_6 = arith.constant 0 : index
    %7 = vector.load %arg6[%c0_4, %c0_5, %c0_6] : memref<3x16x32xf32, #tpu.memory_space<vmem>>, vector<1x16x32xf32>
    %8 = vector.shape_cast %7 : vector<1x16x32xf32> to vector<16x32xf32>
    %9 = vector.shape_cast %6 : vector<16x32xf32> to vector<1x16x32xf32>
    tpu.vector_store %arg6[%c0_4, %c0_5, %c0_6], %9 {strides = array<i32>} : memref<3x16x32xf32, #tpu.memory_space<vmem>>, vector<1x16x32xf32>,
    %10 = vector.extract_strided_slice %5 {offsets = [0, 32], sizes = [16, 32], strides = [1, 1]} : vector<16x96xf32> to vector<16x32xf32>
    %c1 = arith.constant 1 : index
    %c0_7 = arith.constant 0 : index
    %c0_8 = arith.constant 0 : index
    %11 = vector.load %arg6[%c1, %c0_7, %c0_8] : memref<3x16x32xf32, #tpu.memory_space<vmem>>, vector<1x16x32xf32>
    %12 = vector.shape_cast %11 : vector<1x16x32xf32> to vector<16x32xf32>
    %13 = vector.shape_cast %10 : vector<16x32xf32> to vector<1x16x32xf32>
    tpu.vector_store %arg6[%c1, %c0_7, %c0_8], %13 {strides = array<i32>} : memref<3x16x32xf32, #tpu.memory_space<vmem>>, vector<1x16x32xf32>,
    %14 = vector.extract_strided_slice %5 {offsets = [0, 64], sizes = [16, 32], strides = [1, 1]} : vector<16x96xf32> to vector<16x32xf32>
    %c2 = arith.constant 2 : index
    %c0_9 = arith.constant 0 : index
    %c0_10 = arith.constant 0 : index
    %15 = vector.load %arg6[%c2, %c0_9, %c0_10] : memref<3x16x32xf32, #tpu.memory_space<vmem>>, vector<1x16x32xf32>
    %16 = vector.shape_cast %15 : vector<1x16x32xf32> to vector<16x32xf32>
    %17 = vector.shape_cast %14 : vector<16x32xf32> to vector<1x16x32xf32>
    tpu.vector_store %arg6[%c2, %c0_9, %c0_10], %17 {strides = array<i32>} : memref<3x16x32xf32, #tpu.memory_space<vmem>>, vector<1x16x32xf32>,
    return
  }
  func.func @transform_0(%arg0: i32, %arg1: i32) -> (i32, i32) {
    %c0_i32 = arith.constant 0 : i32
    %c0_i32_0 = arith.constant 0 : i32
    return %arg0, %c0_i32 : i32, i32
  }
  func.func @transform_1(%arg0: i32, %arg1: i32) -> (i32, i32) {
    %c0_i32 = arith.constant 0 : i32
    %c0_i32_0 = arith.constant 0 : i32
    %c0_i32_1 = arith.constant 0 : i32
    return %c0_i32, %c0_i32_0 : i32, i32
  }
  func.func @transform_2(%arg0: i32, %arg1: i32) -> (i32, i32) {
    %c0_i32 = arith.constant 0 : i32
    %c0_i32_0 = arith.constant 0 : i32
    %c0_i32_1 = arith.constant 0 : i32
    return %c0_i32, %c0_i32_0 : i32, i32
  }
  func.func @transform_3(%arg0: i32, %arg1: i32) -> (i32, i32) {
    %c0_i32 = arith.constant 0 : i32
    %c0_i32_0 = arith.constant 0 : i32
    return %c0_i32, %arg1 : i32, i32
  }
  func.func @transform_4(%arg0: i32, %arg1: i32) -> (i32, i32, i32) {
    %c0_i32 = arith.constant 0 : i32
    %c0_i32_0 = arith.constant 0 : i32
    %c0_i32_1 = arith.constant 0 : i32
    return %c0_i32, %arg0, %c0_i32_0 : i32, i32, i32
  }
}

</mosaic_0001>

<llo_original>
// kernel: tpu_custom_call.1
$region0: #{tpu_custom_call.1}
  #allocation0 [shape = 'u32[]', space=smem, size = 0x4, offset = 0x4, fixed_abs, tag = 'smem constant byte address 0x4 - core index']
  #allocation1 [shape = 'u32[144,128]{1,0:T(1,128)}', space=vmem, size = 0x12000, scoped, tag = 'internal scratch']
  #allocation2 [shape = 'f32[16,32]{1,0:T(8,128)}', space=vmem, size = 0x2000, scoped, tag = 'scratch operand']
  %s0 = inlined_call_operand.hbm [shape: f32[16,32], index: 0, kind: input, shape index: {}]
  %s1 = inlined_call_operand.vmem [shape: f32[1,32], index: 1, kind: input, shape index: {}]
  %s2 = inlined_call_operand.vmem [shape: f32[1,32], index: 2, kind: input, shape index: {}]
  %s3 = inlined_call_operand.hbm [shape: f32[32,96], index: 3, kind: input, shape index: {}]
  %s4 = inlined_call_operand.hbm [shape: f32[3,16,32], index: 4, kind: output, shape index: {}]
  %s5 = sld [smem:[#allocation0]]
  $region38: #{tpu_custom_call.1} parent=0
    _
  %s7 = ssub.s32 1, %s5
  %s8 = scalar_select 0, %s7, %s5
  $region1: #{tpu_custom_call.1} parent=0
    #allocation3 [shape = 'u8[8192]{0}', space=vmem, size = 0x2000, scoped, tag = 'input window, operand 0, single buffered']
    #allocation4 [shape = 's32[1]{0}', space=sflag, size = 0x4, scoped, tag = 'scoped memory for tpu_custom_call.1']
    #allocation5 [shape = 's32[1]{0}', space=sflag, size = 0x4, scoped, tag = 'scoped memory for tpu_custom_call.1']
    #allocation6 [shape = 'u8[16384]{0}', space=vmem, size = 0x4000, scoped, tag = 'input window, operand 3, single buffered']
    #allocation7 [shape = 's32[1]{0}', space=sflag, size = 0x4, scoped, tag = 'scoped memory for tpu_custom_call.1']
    #allocation8 [shape = 'u8[24576]{0}', space=vmem, size = 0x6000, scoped, tag = 'output window, operand 0, single buffered']
    %9 = vsyncpa [#allocation4], 0
    %10 = vsyncpa [#allocation7], 0
    %11 = vsyncpa [#allocation5], 0
    // Predicated region
    $region2: #{tpu_custom_call.1} parent=1 // pred_check
      _
    $region3: #{tpu_custom_call.1} parent=1 // pred_check_branch
      %13 = sbr.rel (0) target = $region5
    $region4: #{tpu_custom_call.1} parent=1 // pred_region
      %s15 = ssub.s32 256, 256
      %16 = vsyncadd [#allocation4], %s15
      %s17 = sshll.u32 [#allocation3], 4
      %s18 = int_to_ptr.vmem [resolvable:$true] %s17
      %23 = dma.hbm_to_vmem [thread:$0]  %s0, 256, %s18, [#allocation4], 128, 128, 8
    $region5: #{tpu_custom_call.1} parent=1 // pred_fallthru
      _
    // Predicated region
    $region6: #{tpu_custom_call.1} parent=1 // pred_check
      _
    $region7: #{tpu_custom_call.1} parent=1 // pred_check_branch
      %25 = sbr.rel (0) target = $region9
    $region8: #{tpu_custom_call.1} parent=1 // pred_region
      _
    $region9: #{tpu_custom_call.1} parent=1 // pred_fallthru
      _
    // Predicated region
    $region10: #{tpu_custom_call.1} parent=1 // pred_check
      _
    $region11: #{tpu_custom_call.1} parent=1 // pred_check_branch
      %27 = sbr.rel (0) target = $region13
    $region12: #{tpu_custom_call.1} parent=1 // pred_region
      _
    $region13: #{tpu_custom_call.1} parent=1 // pred_fallthru
      _
    // Predicated region
    $region14: #{tpu_custom_call.1} parent=1 // pred_check
      _
    $region15: #{tpu_custom_call.1} parent=1 // pred_check_branch
      %29 = sbr.rel (0) target = $region17
    $region16: #{tpu_custom_call.1} parent=1 // pred_region
      %s31 = ssub.s32 512, 512
      %32 = vsyncadd [#allocation7], %s31
      %s33 = sshll.u32 [#allocation6], 4
      %s34 = int_to_ptr.vmem [resolvable:$true] %s33
      %39 = dma.hbm_to_vmem [thread:$0]  %s3, 512, %s34, [#allocation7], 128, 128, 8
    $region17: #{tpu_custom_call.1} parent=1 // pred_fallthru
      _
    // Predicated region
    $region18: #{tpu_custom_call.1} parent=1 // pred_check
      _
    $region19: #{tpu_custom_call.1} parent=1 // pred_check_branch
      %41 = sbr.rel (0) target = $region21
    $region20: #{tpu_custom_call.1} parent=1 // pred_region
      %42 = dma.done [#allocation4], 256
    $region21: #{tpu_custom_call.1} parent=1 // pred_fallthru
      _
    // Predicated region
    $region22: #{tpu_custom_call.1} parent=1 // pred_check
      _
    $region23: #{tpu_custom_call.1} parent=1 // pred_check_branch
      %44 = sbr.rel (0) target = $region25
    $region24: #{tpu_custom_call.1} parent=1 // pred_region
      %45 = dma.done [#allocation7], 512
    $region25: #{tpu_custom_call.1} parent=1 // pred_fallthru
      _
    %p46 = scmp.eq.s32.totalorder 0, 0
    // Predicated region
    $region26: #{tpu_custom_call.1} parent=1 // pred_check
      %p47 = pneg %p46
    $region27: #{tpu_custom_call.1} parent=1 // pred_check_branch
      %49 = sbr.rel (%p47) target = $region29
    $region28: #{tpu_custom_call.1} parent=1 // pred_region
      %v50 = vld [vmem:[#allocation3] sm:$0xff]
      %v51 = vld [vmem:[#allocation3 + $0x8] sm:$0xff]
      %vm52 = vcmask 261120
      %v53 = vsel %vm52, %v50, 0.0
      %54 = vadd.xlane.f32.xlu0 %v53
      %v55 = vpop.xlane.xlu0 %54
      %v56 = vsel %vm52, %v51, 0.0
      %57 = vadd.xlane.f32.xlu0 %v56
      %v58 = vpop.xlane.xlu0 %57
      %v59 = vrcp.pop 32.0
      %v60 = vmul.f32 %v55, %v59
      %v61 = vmul.f32 %v58, %v59
      %v62 = vsub.f32 %v50, %v60
      %v63 = vsub.f32 %v51, %v61
      %v64 = vmul.f32 %v62, %v62
      %v65 = vmul.f32 %v63, %v63
      %v66 = vsel %vm52, %v64, 0.0
      %67 = vadd.xlane.f32.xlu0 %v66
      %v68 = vpop.xlane.xlu0 %67
      %v69 = vsel %vm52, %v65, 0.0
      %70 = vadd.xlane.f32.xlu0 %v69
      %v71 = vpop.xlane.xlu0 %70
      %v72 = vmul.f32 %v68, 0.032258064
      %v73 = vmul.f32 %v71, 0.032258064
      %v74 = vrsqrt.pop %v72
      %v75 = vmul.f32 %v72, %v74
      %vm76 = vcmp.eq.f32.partialorder %v72, inf
      %v77 = vsel %vm76, %v72, %v75
      %vm78 = vcmp.eq.f32.partialorder %v72, 0.0
      %v79 = vand.u32 %v72, 2147483648
      %v80 = vsel %vm78, %v79, %v77
      %v81 = vrsqrt.pop %v73
      %v82 = vmul.f32 %v73, %v81
      %vm83 = vcmp.eq.f32.partialorder %v73, inf
      %v84 = vsel %vm83, %v73, %v82
      %vm85 = vcmp.eq.f32.partialorder %v73, 0.0
      %v86 = vand.u32 %v73, 2147483648
      %v87 = vsel %vm85, %v86, %v84
      %v88 = vadd.f32 %v80, 1e-06
      %v89 = vadd.f32 %v87, 1e-06
      %v90 = vrcp.pop %v88
      %v91 = vrcp.pop %v89
      %v92 = vld [vmem:[%s1] sm:$0x1]
      %v93 = vmul.f32 %v62, %v90
      %v94 = vmul.f32 %v63, %v91
      %v96 = vlaneseq
      %v97 = vshrl.u32 %v96, 7
      %v98 = vsub.s32 0, %v97
      %v99 = vrot.slane %v92, %v98
      %v101 = vmul.f32 %v99, %v93
      %v102 = vmul.f32 %v99, %v94
      %v103 = vld [vmem:[%s2] sm:$0x1]
      %v105 = vlaneseq
      %v106 = vshrl.u32 %v105, 7
      %v107 = vsub.s32 0, %v106
      %v108 = vrot.slane %v103, %v107
      %v110 = vadd.f32 %v101, %v108
      %v111 = vadd.f32 %v102, %v108
      %112 = vst.msk [vmem:[#allocation2] sm:$0xff] %vm52, %v110
      %113 = vst.msk [vmem:[#allocation2 + $0x8] sm:$0xff] %vm52, %v111
    $region29: #{tpu_custom_call.1} parent=1 // pred_fallthru
      _
    %v114 = vld [vmem:[#allocation2] sm:$0xff]
    %v115 = vld [vmem:[#allocation2 + $0x8] sm:$0xff]
    %v116 = vld [vmem:[#allocation6] sm:$0xff]
    %v117 = vld [vmem:[#allocation6 + $0x8] sm:$0xff]
    %v118 = vld [vmem:[#allocation6 + $0x10] sm:$0xff]
    %v119 = vld [vmem:[#allocation6 + $0x18] sm:$0xff]
    %vm120 = vcmask 261120
    %v122 = vsel %vm120, %v114, 0
    %v125 = vsel %vm120, %v115, 0
    %127 = vmatprep.subr.mxu0 0.0
    %128 = vmatpush1.msra.mxu0 0.0
    %129 = vmatprep.subr.mxu0 0.0
    %130 = vmatpush1.msra.mxu0 0.0
    %131 = vmatprep.subr.mxu0 0.0
    %132 = vmatpush1.msra.mxu0 0.0
    %133 = vmatprep.subr.mxu0 0.0
    %134 = vmatpush1.msra.mxu0 0.0
    %135 = vmatprep.subr.mxu0 0.0
    %136 = vmatpush1.msra.mxu0 0.0
    %137 = vmatprep.subr.mxu0 0.0
    %138 = vmatpush1.msra.mxu0 0.0
    %139 = vmatprep.subr.mxu0 0.0
    %140 = vmatpush1.msra.mxu0 0.0
    %141 = vmatprep.subr.mxu0 0.0
    %142 = vmatpush1.msra.mxu0 0.0
    %143 = vmatprep.subr.mxu0 0.0
    %144 = vmatpush1.msra.mxu0 0.0
    %145 = vmatprep.subr.mxu0 0.0
    %146 = vmatpush1.msra.mxu0 0.0
    %147 = vmatprep.subr.mxu0 0.0
    %148 = vmatpush1.msra.mxu0 0.0
    %149 = vmatprep.subr.mxu0 0.0
    %150 = vmatpush1.msra.mxu0 0.0
    %151 = vmatprep.subr.mxu0 0.0
    %v152 = vand.u32 %v119, 4294901760
    %153 = vmatpush1.msra.mxu0 %v152
    %154 = vmatprep.subr.mxu0 0.0
    %v155 = vand.u32 %v118, 4294901760
    %156 = vmatpush1.msra.mxu0 %v155
    %157 = vmatprep.subr.mxu0 0.0
    %v158 = vand.u32 %v117, 4294901760
    %159 = vmatpush1.msra.mxu0 %v158
    %160 = vmatprep.subr.mxu0 0.0
    %v161 = vand.u32 %v116, 4294901760
    %162 = vmatpush1.msra.mxu0 %v161
    %163 = vmatprep.subr.mxu0 0.0
    %164 = vmatpush2.msra.mxu0 0.0
    %165 = vmatprep.subr.mxu0 0.0
    %166 = vmatpush2.msra.mxu0 0.0
    %167 = vmatprep.subr.mxu0 0.0
    %168 = vmatpush2.msra.mxu0 0.0
    %169 = vmatprep.subr.mxu0 0.0
    %170 = vmatpush2.msra.mxu0 0.0
    %171 = vmatprep.subr.mxu0 0.0
    %172 = vmatpush2.msra.mxu0 0.0
    %173 = vmatprep.subr.mxu0 0.0
    %174 = vmatpush2.msra.mxu0 0.0
    %175 = vmatprep.subr.mxu0 0.0
    %176 = vmatpush2.msra.mxu0 0.0
    %177 = vmatprep.subr.mxu0 0.0
    %178 = vmatpush2.msra.mxu0 0.0
    %179 = vmatprep.subr.mxu0 0.0
    %180 = vmatpush2.msra.mxu0 0.0
    %181 = vmatprep.subr.mxu0 0.0
    %182 = vmatpush2.msra.mxu0 0.0
    %183 = vmatprep.subr.mxu0 0.0
    %184 = vmatpush2.msra.mxu0 0.0
    %185 = vmatprep.subr.mxu0 0.0
    %186 = vmatpush2.msra.mxu0 0.0
    %187 = vmatprep.subr.mxu0 0.0
    %188 = vmatpush2.msra.mxu0 0.0
    %189 = vmatprep.subr.mxu0 0.0
    %190 = vmatpush2.msra.mxu0 0.0
    %191 = vmatprep.subr.mxu0 0.0
    %192 = vmatpush2.msra.mxu0 0.0
    %193 = vmatprep.subr.mxu0 0.0
    %194 = vmatpush2.msra.mxu0 0.0
    %195 = vmatprep.mubr.f32.mxu0 0.0
    %v196 = vand.u32 %v122, 4294901760
    %v197 = vsub.f32 %v122, %v196
    %v198 = vand.u32 %v197, 4294901760
    %v199 = vsub.f32 %v197, %v198
    %v200 = vand.u32 %v199, 4294901760
    %201 = vmatmul.mubr.f32.gmra.mxu0 %v200
    %v202 = vpop.f32.mrf.mxu0
    %v203 = vadd.f32 0.0, %v202
    %v204 = vpop.f32.mrf.mxu0
    %205 = vmatprep.mubr.f32.mxu0 0.0
    %v206 = vand.u32 %v125, 4294901760
    %v207 = vsub.f32 %v125, %v206
    %v208 = vand.u32 %v207, 4294901760
    %v209 = vsub.f32 %v207, %v208
    %v210 = vand.u32 %v209, 4294901760
    %211 = vmatmul.mubr.f32.gmra.mxu0 %v210
    %v212 = vpop.f32.mrf.mxu0
    %v213 = vadd.f32 0.0, %v212
    %v214 = vpop.f32.mrf.mxu0
    %215 = vdwg.mxu0
    %216 = vmatprep.subr.mxu0 0.0
    %217 = vmatpush1.msra.mxu0 0.0
    %218 = vmatprep.subr.mxu0 0.0
    %219 = vmatpush1.msra.mxu0 0.0
    %220 = vmatprep.subr.mxu0 0.0
    %221 = vmatpush1.msra.mxu0 0.0
    %222 = vmatprep.subr.mxu0 0.0
    %223 = vmatpush1.msra.mxu0 0.0
    %224 = vmatprep.subr.mxu0 0.0
    %225 = vmatpush1.msra.mxu0 0.0
    %226 = vmatprep.subr.mxu0 0.0
    %227 = vmatpush1.msra.mxu0 0.0
    %228 = vmatprep.subr.mxu0 0.0
    %229 = vmatpush1.msra.mxu0 0.0
    %230 = vmatprep.subr.mxu0 0.0
    %231 = vmatpush1.msra.mxu0 0.0
    %232 = vmatprep.subr.mxu0 0.0
    %233 = vmatpush1.msra.mxu0 0.0
    %234 = vmatprep.subr.mxu0 0.0
    %235 = vmatpush1.msra.mxu0 0.0
    %236 = vmatprep.subr.mxu0 0.0
    %237 = vmatpush1.msra.mxu0 0.0
    %238 = vmatprep.subr.mxu0 0.0
    %239 = vmatpush1.msra.mxu0 0.0
    %240 = vmatprep.subr.mxu0 0.0
    %v241 = vand.u32 %v119, 4294901760
    %v242 = vsub.f32 %v119, %v241
    %v243 = vand.u32 %v242, 4294901760
    %v244 = vsub.f32 %v242, %v243
    %v245 = vand.u32 %v244, 4294901760
    %246 = vmatpush1.msra.mxu0 %v245
    %247 = vmatprep.subr.mxu0 0.0
    %v248 = vand.u32 %v118, 4294901760
    %v249 = vsub.f32 %v118, %v248
    %v250 = vand.u32 %v249, 4294901760
    %v251 = vsub.f32 %v249, %v250
    %v252 = vand.u32 %v251, 4294901760
    %253 = vmatpush1.msra.mxu0 %v252
    %254 = vmatprep.subr.mxu0 0.0
    %v255 = vand.u32 %v117, 4294901760
    %v256 = vsub.f32 %v117, %v255
    %v257 = vand.u32 %v256, 4294901760
    %v258 = vsub.f32 %v256, %v257
    %v259 = vand.u32 %v258, 4294901760
    %260 = vmatpush1.msra.mxu0 %v259
    %261 = vmatprep.subr.mxu0 0.0
    %v262 = vand.u32 %v116, 4294901760
    %v263 = vsub.f32 %v116, %v262
    %v264 = vand.u32 %v263, 4294901760
    %v265 = vsub.f32 %v263, %v264
    %v266 = vand.u32 %v265, 4294901760
    %267 = vmatpush1.msra.mxu0 %v266
    %268 = vmatprep.subr.mxu0 0.0
    %269 = vmatpush2.msra.mxu0 0.0
    %270 = vmatprep.subr.mxu0 0.0
    %271 = vmatpush2.msra.mxu0 0.0
    %272 = vmatprep.subr.mxu0 0.0
    %273 = vmatpush2.msra.mxu0 0.0
    %274 = vmatprep.subr.mxu0 0.0
    %275 = vmatpush2.msra.mxu0 0.0
    %276 = vmatprep.subr.mxu0 0.0
    %277 = vmatpush2.msra.mxu0 0.0
    %278 = vmatprep.subr.mxu0 0.0
    %279 = vmatpush2.msra.mxu0 0.0
    %280 = vmatprep.subr.mxu0 0.0
    %281 = vmatpush2.msra.mxu0 0.0
    %282 = vmatprep.subr.mxu0 0.0
    %283 = vmatpush2.msra.mxu0 0.0
    %284 = vmatprep.subr.mxu0 0.0
    %285 = vmatpush2.msra.mxu0 0.0
    %286 = vmatprep.subr.mxu0 0.0
    %287 = vmatpush2.msra.mxu0 0.0
    %288 = vmatprep.subr.mxu0 0.0
    %289 = vmatpush2.msra.mxu0 0.0
    %290 = vmatprep.subr.mxu0 0.0
    %291 = vmatpush2.msra.mxu0 0.0
    %292 = vmatprep.subr.mxu0 0.0
    %293 = vmatpush2.msra.mxu0 0.0
    %294 = vmatprep.subr.mxu0 0.0
    %295 = vmatpush2.msra.mxu0 0.0
    %296 = vmatprep.subr.mxu0 0.0
    %297 = vmatpush2.msra.mxu0 0.0
    %298 = vmatprep.subr.mxu0 0.0
    %299 = vmatpush2.msra.mxu0 0.0
    %300 = vmatprep.mubr.f32.mxu0 0.0
    %v301 = vand.u32 %v122, 4294901760
    %302 = vmatmul.mubr.f32.gmra.mxu0 %v301
    %v303 = vpop.f32.mrf.mxu0
    %v304 = vadd.f32 %v203, %v303
    %v305 = vpop.f32.mrf.mxu0
    %306 = vmatprep.mubr.f32.mxu0 0.0
    %v307 = vand.u32 %v125, 4294901760
    %308 = vmatmul.mubr.f32.gmra.mxu0 %v307
    %v309 = vpop.f32.mrf.mxu0
    %v310 = vadd.f32 %v213, %v309
    %v311 = vpop.f32.mrf.mxu0
    %312 = vdwg.mxu0
    %313 = vmatprep.subr.mxu0 0.0
    %314 = vmatpush1.msra.mxu0 0.0
    %315 = vmatprep.subr.mxu0 0.0
    %316 = vmatpush1.msra.mxu0 0.0
    %317 = vmatprep.subr.mxu0 0.0
    %318 = vmatpush1.msra.mxu0 0.0
    %319 = vmatprep.subr.mxu0 0.0
    %320 = vmatpush1.msra.mxu0 0.0
    %321 = vmatprep.subr.mxu0 0.0
    %322 = vmatpush1.msra.mxu0 0.0
    %323 = vmatprep.subr.mxu0 0.0
    %324 = vmatpush1.msra.mxu0 0.0
    %325 = vmatprep.subr.mxu0 0.0
    %326 = vmatpush1.msra.mxu0 0.0
    %327 = vmatprep.subr.mxu0 0.0
    %328 = vmatpush1.msra.mxu0 0.0
    %329 = vmatprep.subr.mxu0 0.0
    %330 = vmatpush1.msra.mxu0 0.0
    %331 = vmatprep.subr.mxu0 0.0
    %332 = vmatpush1.msra.mxu0 0.0
    %333 = vmatprep.subr.mxu0 0.0
    %334 = vmatpush1.msra.mxu0 0.0
    %335 = vmatprep.subr.mxu0 0.0
    %336 = vmatpush1.msra.mxu0 0.0
    %337 = vmatprep.subr.mxu0 0.0
    %v338 = vand.u32 %v119, 4294901760
    %v339 = vsub.f32 %v119, %v338
    %340 = vmatpush1.msra.mxu0 %v339
    %341 = vmatprep.subr.mxu0 0.0
    %v342 = vand.u32 %v118, 4294901760
    %v343 = vsub.f32 %v118, %v342
    %344 = vmatpush1.msra.mxu0 %v343
    %345 = vmatprep.subr.mxu0 0.0
    %v346 = vand.u32 %v117, 4294901760
    %v347 = vsub.f32 %v117, %v346
    %348 = vmatpush1.msra.mxu0 %v347
    %349 = vmatprep.subr.mxu0 0.0
    %v350 = vand.u32 %v116, 4294901760
    %v351 = vsub.f32 %v116, %v350
    %352 = vmatpush1.msra.mxu0 %v351
    %353 = vmatprep.subr.mxu0 0.0
    %354 = vmatpush2.msra.mxu0 0.0
    %355 = vmatprep.subr.mxu0 0.0
    %356 = vmatpush2.msra.mxu0 0.0
    %357 = vmatprep.subr.mxu0 0.0
    %358 = vmatpush2.msra.mxu0 0.0
    %359 = vmatprep.subr.mxu0 0.0
    %360 = vmatpush2.msra.mxu0 0.0
    %361 = vmatprep.subr.mxu0 0.0
    %362 = vmatpush2.msra.mxu0 0.0
    %363 = vmatprep.subr.mxu0 0.0
    %364 = vmatpush2.msra.mxu0 0.0
    %365 = vmatprep.subr.mxu0 0.0
    %366 = vmatpush2.msra.mxu0 0.0
    %367 = vmatprep.subr.mxu0 0.0
    %368 = vmatpush2.msra.mxu0 0.0
    %369 = vmatprep.subr.mxu0 0.0
    %370 = vmatpush2.msra.mxu0 0.0
    %371 = vmatprep.subr.mxu0 0.0
    %372 = vmatpush2.msra.mxu0 0.0
    %373 = vmatprep.subr.mxu0 0.0
    %374 = vmatpush2.msra.mxu0 0.0
    %375 = vmatprep.subr.mxu0 0.0
    %376 = vmatpush2.msra.mxu0 0.0
    %377 = vmatprep.subr.mxu0 0.0
    %378 = vmatpush2.msra.mxu0 0.0
    %379 = vmatprep.subr.mxu0 0.0
    %380 = vmatpush2.msra.mxu0 0.0
    %381 = vmatprep.subr.mxu0 0.0
    %382 = vmatpush2.msra.mxu0 0.0
    %383 = vmatprep.subr.mxu0 0.0
    %384 = vmatpush2.msra.mxu0 0.0
    %385 = vmatprep.mubr.f32.mxu0 0.0
    %v386 = vand.u32 %v122, 4294901760
    %v387 = vsub.f32 %v122, %v386
    %388 = vmatmul.mubr.f32.gmra.mxu0 %v387
    %v389 = vpop.f32.mrf.mxu0
    %v390 = vadd.f32 %v304, %v389
    %v391 = vpop.f32.mrf.mxu0
    %392 = vmatprep.mubr.f32.mxu0 0.0
    %v393 = vand.u32 %v125, 4294901760
    %v394 = vsub.f32 %v125, %v393
    %395 = vmatmul.mubr.f32.gmra.mxu0 %v394
    %v396 = vpop.f32.mrf.mxu0
    %v397 = vadd.f32 %v310, %v396
    %v398 = vpop.f32.mrf.mxu0
    %399 = vdwg.mxu0
    %400 = vmatprep.subr.mxu0 0.0
    %401 = vmatpush1.msra.mxu0 0.0
    %402 = vmatprep.subr.mxu0 0.0
    %403 = vmatpush1.msra.mxu0 0.0
    %404 = vmatprep.subr.mxu0 0.0
    %405 = vmatpush1.msra.mxu0 0.0
    %406 = vmatprep.subr.mxu0 0.0
    %407 = vmatpush1.msra.mxu0 0.0
    %408 = vmatprep.subr.mxu0 0.0
    %409 = vmatpush1.msra.mxu0 0.0
    %410 = vmatprep.subr.mxu0 0.0
    %411 = vmatpush1.msra.mxu0 0.0
    %412 = vmatprep.subr.mxu0 0.0
    %413 = vmatpush1.msra.mxu0 0.0
    %414 = vmatprep.subr.mxu0 0.0
    %415 = vmatpush1.msra.mxu0 0.0
    %416 = vmatprep.subr.mxu0 0.0
    %417 = vmatpush1.msra.mxu0 0.0
    %418 = vmatprep.subr.mxu0 0.0
    %419 = vmatpush1.msra.mxu0 0.0
    %420 = vmatprep.subr.mxu0 0.0
    %421 = vmatpush1.msra.mxu0 0.0
    %422 = vmatprep.subr.mxu0 0.0
    %423 = vmatpush1.msra.mxu0 0.0
    %424 = vmatprep.subr.mxu0 0.0
    %v425 = vand.u32 %v119, 4294901760
    %426 = vmatpush1.msra.mxu0 %v425
    %427 = vmatprep.subr.mxu0 0.0
    %v428 = vand.u32 %v118, 4294901760
    %429 = vmatpush1.msra.mxu0 %v428
    %430 = vmatprep.subr.mxu0 0.0
    %v431 = vand.u32 %v117, 4294901760
    %432 = vmatpush1.msra.mxu0 %v431
    %433 = vmatprep.subr.mxu0 0.0
    %v434 = vand.u32 %v116, 4294901760
    %435 = vmatpush1.msra.mxu0 %v434
    %436 = vmatprep.subr.mxu0 0.0
    %437 = vmatpush2.msra.mxu0 0.0
    %438 = vmatprep.subr.mxu0 0.0
    %439 = vmatpush2.msra.mxu0 0.0
    %440 = vmatprep.subr.mxu0 0.0
    %441 = vmatpush2.msra.mxu0 0.0
    %442 = vmatprep.subr.mxu0 0.0
    %443 = vmatpush2.msra.mxu0 0.0
    %444 = vmatprep.subr.mxu0 0.0
    %445 = vmatpush2.msra.mxu0 0.0
    %446 = vmatprep.subr.mxu0 0.0
    %447 = vmatpush2.msra.mxu0 0.0
    %448 = vmatprep.subr.mxu0 0.0
    %449 = vmatpush2.msra.mxu0 0.0
    %450 = vmatprep.subr.mxu0 0.0
    %451 = vmatpush2.msra.mxu0 0.0
    %452 = vmatprep.subr.mxu0 0.0
    %453 = vmatpush2.msra.mxu0 0.0
    %454 = vmatprep.subr.mxu0 0.0
    %455 = vmatpush2.msra.mxu0 0.0
    %456 = vmatprep.subr.mxu0 0.0
    %457 = vmatpush2.msra.mxu0 0.0
    %458 = vmatprep.subr.mxu0 0.0
    %459 = vmatpush2.msra.mxu0 0.0
    %460 = vmatprep.subr.mxu0 0.0
    %461 = vmatpush2.msra.mxu0 0.0
    %462 = vmatprep.subr.mxu0 0.0
    %463 = vmatpush2.msra.mxu0 0.0
    %464 = vmatprep.subr.mxu0 0.0
    %465 = vmatpush2.msra.mxu0 0.0
    %466 = vmatprep.subr.mxu0 0.0
    %467 = vmatpush2.msra.mxu0 0.0
    %468 = vmatprep.mubr.f32.mxu0 0.0
    %v469 = vand.u32 %v122, 4294901760
    %v470 = vsub.f32 %v122, %v469
    %v471 = vand.u32 %v470, 4294901760
    %472 = vmatmul.mubr.f32.gmra.mxu0 %v471
    %v473 = vpop.f32.mrf.mxu0
    %v474 = vadd.f32 %v390, %v473
    %v475 = vpop.f32.mrf.mxu0
    %476 = vmatprep.mubr.f32.mxu0 0.0
    %v477 = vand.u32 %v125, 4294901760
    %v478 = vsub.f32 %v125, %v477
    %v479 = vand.u32 %v478, 4294901760
    %480 = vmatmul.mubr.f32.gmra.mxu0 %v479
    %v481 = vpop.f32.mrf.mxu0
    %v482 = vadd.f32 %v397, %v481
    %v483 = vpop.f32.mrf.mxu0
    %484 = vdwg.mxu0
    %485 = vmatprep.subr.mxu0 0.0
    %486 = vmatpush1.msra.mxu0 0.0
    %487 = vmatprep.subr.mxu0 0.0
    %488 = vmatpush1.msra.mxu0 0.0
    %489 = vmatprep.subr.mxu0 0.0
    %490 = vmatpush1.msra.mxu0 0.0
    %491 = vmatprep.subr.mxu0 0.0
    %492 = vmatpush1.msra.mxu0 0.0
    %493 = vmatprep.subr.mxu0 0.0
    %494 = vmatpush1.msra.mxu0 0.0
    %495 = vmatprep.subr.mxu0 0.0
    %496 = vmatpush1.msra.mxu0 0.0
    %497 = vmatprep.subr.mxu0 0.0
    %498 = vmatpush1.msra.mxu0 0.0
    %499 = vmatprep.subr.mxu0 0.0
    %500 = vmatpush1.msra.mxu0 0.0
    %501 = vmatprep.subr.mxu0 0.0
    %502 = vmatpush1.msra.mxu0 0.0
    %503 = vmatprep.subr.mxu0 0.0
    %504 = vmatpush1.msra.mxu0 0.0
    %505 = vmatprep.subr.mxu0 0.0
    %506 = vmatpush1.msra.mxu0 0.0
    %507 = vmatprep.subr.mxu0 0.0
    %508 = vmatpush1.msra.mxu0 0.0
    %509 = vmatprep.subr.mxu0 0.0
    %v510 = vand.u32 %v119, 4294901760
    %v511 = vsub.f32 %v119, %v510
    %v512 = vand.u32 %v511, 4294901760
    %513 = vmatpush1.msra.mxu0 %v512
    %514 = vmatprep.subr.mxu0 0.0
    %v515 = vand.u32 %v118, 4294901760
    %v516 = vsub.f32 %v118, %v515
    %v517 = vand.u32 %v516, 4294901760
    %518 = vmatpush1.msra.mxu0 %v517
    %519 = vmatprep.subr.mxu0 0.0
    %v520 = vand.u32 %v117, 4294901760
    %v521 = vsub.f32 %v117, %v520
    %v522 = vand.u32 %v521, 4294901760
    %523 = vmatpush1.msra.mxu0 %v522
    %524 = vmatprep.subr.mxu0 0.0
    %v525 = vand.u32 %v116, 4294901760
    %v526 = vsub.f32 %v116, %v525
    %v527 = vand.u32 %v526, 4294901760
    %528 = vmatpush1.msra.mxu0 %v527
    %529 = vmatprep.subr.mxu0 0.0
    %530 = vmatpush2.msra.mxu0 0.0
    %531 = vmatprep.subr.mxu0 0.0
    %532 = vmatpush2.msra.mxu0 0.0
    %533 = vmatprep.subr.mxu0 0.0
    %534 = vmatpush2.msra.mxu0 0.0
    %535 = vmatprep.subr.mxu0 0.0
    %536 = vmatpush2.msra.mxu0 0.0
    %537 = vmatprep.subr.mxu0 0.0
    %538 = vmatpush2.msra.mxu0 0.0
    %539 = vmatprep.subr.mxu0 0.0
    %540 = vmatpush2.msra.mxu0 0.0
    %541 = vmatprep.subr.mxu0 0.0
    %542 = vmatpush2.msra.mxu0 0.0
    %543 = vmatprep.subr.mxu0 0.0
    %544 = vmatpush2.msra.mxu0 0.0
    %545 = vmatprep.subr.mxu0 0.0
    %546 = vmatpush2.msra.mxu0 0.0
    %547 = vmatprep.subr.mxu0 0.0
    %548 = vmatpush2.msra.mxu0 0.0
    %549 = vmatprep.subr.mxu0 0.0
    %550 = vmatpush2.msra.mxu0 0.0
    %551 = vmatprep.subr.mxu0 0.0
    %552 = vmatpush2.msra.mxu0 0.0
    %553 = vmatprep.subr.mxu0 0.0
    %554 = vmatpush2.msra.mxu0 0.0
    %555 = vmatprep.subr.mxu0 0.0
    %556 = vmatpush2.msra.mxu0 0.0
    %557 = vmatprep.subr.mxu0 0.0
    %558 = vmatpush2.msra.mxu0 0.0
    %559 = vmatprep.subr.mxu0 0.0
    %560 = vmatpush2.msra.mxu0 0.0
    %561 = vmatprep.mubr.f32.mxu0 0.0
    %v562 = vand.u32 %v122, 4294901760
    %563 = vmatmul.mubr.f32.gmra.mxu0 %v562
    %v564 = vpop.f32.mrf.mxu0
    %v565 = vadd.f32 %v474, %v564
    %v566 = vpop.f32.mrf.mxu0
    %567 = vmatprep.mubr.f32.mxu0 0.0
    %v568 = vand.u32 %v125, 4294901760
    %569 = vmatmul.mubr.f32.gmra.mxu0 %v568
    %v570 = vpop.f32.mrf.mxu0
    %v571 = vadd.f32 %v482, %v570
    %v572 = vpop.f32.mrf.mxu0
    %573 = vdwg.mxu0
    %574 = vmatprep.subr.mxu0 0.0
    %575 = vmatpush1.msra.mxu0 0.0
    %576 = vmatprep.subr.mxu0 0.0
    %577 = vmatpush1.msra.mxu0 0.0
    %578 = vmatprep.subr.mxu0 0.0
    %579 = vmatpush1.msra.mxu0 0.0
    %580 = vmatprep.subr.mxu0 0.0
    %581 = vmatpush1.msra.mxu0 0.0
    %582 = vmatprep.subr.mxu0 0.0
    %583 = vmatpush1.msra.mxu0 0.0
    %584 = vmatprep.subr.mxu0 0.0
    %585 = vmatpush1.msra.mxu0 0.0
    %586 = vmatprep.subr.mxu0 0.0
    %587 = vmatpush1.msra.mxu0 0.0
    %588 = vmatprep.subr.mxu0 0.0
    %589 = vmatpush1.msra.mxu0 0.0
    %590 = vmatprep.subr.mxu0 0.0
    %591 = vmatpush1.msra.mxu0 0.0
    %592 = vmatprep.subr.mxu0 0.0
    %593 = vmatpush1.msra.mxu0 0.0
    %594 = vmatprep.subr.mxu0 0.0
    %595 = vmatpush1.msra.mxu0 0.0
    %596 = vmatprep.subr.mxu0 0.0
    %597 = vmatpush1.msra.mxu0 0.0
    %598 = vmatprep.subr.mxu0 0.0
    %v599 = vand.u32 %v119, 4294901760
    %600 = vmatpush1.msra.mxu0 %v599
    %601 = vmatprep.subr.mxu0 0.0
    %v602 = vand.u32 %v118, 4294901760
    %603 = vmatpush1.msra.mxu0 %v602
    %604 = vmatprep.subr.mxu0 0.0
    %v605 = vand.u32 %v117, 4294901760
    %606 = vmatpush1.msra.mxu0 %v605
    %607 = vmatprep.subr.mxu0 0.0
    %v608 = vand.u32 %v116, 4294901760
    %609 = vmatpush1.msra.mxu0 %v608
    %610 = vmatprep.subr.mxu0 0.0
    %611 = vmatpush2.msra.mxu0 0.0
    %612 = vmatprep.subr.mxu0 0.0
    %613 = vmatpush2.msra.mxu0 0.0
    %614 = vmatprep.subr.mxu0 0.0
    %615 = vmatpush2.msra.mxu0 0.0
    %616 = vmatprep.subr.mxu0 0.0
    %617 = vmatpush2.msra.mxu0 0.0
    %618 = vmatprep.subr.mxu0 0.0
    %619 = vmatpush2.msra.mxu0 0.0
    %620 = vmatprep.subr.mxu0 0.0
    %621 = vmatpush2.msra.mxu0 0.0
    %622 = vmatprep.subr.mxu0 0.0
    %623 = vmatpush2.msra.mxu0 0.0
    %624 = vmatprep.subr.mxu0 0.0
    %625 = vmatpush2.msra.mxu0 0.0
    %626 = vmatprep.subr.mxu0 0.0
    %627 = vmatpush2.msra.mxu0 0.0
    %628 = vmatprep.subr.mxu0 0.0
    %629 = vmatpush2.msra.mxu0 0.0
    %630 = vmatprep.subr.mxu0 0.0
    %631 = vmatpush2.msra.mxu0 0.0
    %632 = vmatprep.subr.mxu0 0.0
    %633 = vmatpush2.msra.mxu0 0.0
    %634 = vmatprep.subr.mxu0 0.0
    %635 = vmatpush2.msra.mxu0 0.0
    %636 = vmatprep.subr.mxu0 0.0
    %637 = vmatpush2.msra.mxu0 0.0
    %638 = vmatprep.subr.mxu0 0.0
    %639 = vmatpush2.msra.mxu0 0.0
    %640 = vmatprep.subr.mxu0 0.0
    %641 = vmatpush2.msra.mxu0 0.0
    %642 = vmatprep.mubr.f32.mxu0 0.0
    %v643 = vand.u32 %v122, 4294901760
    %644 = vmatmul.mubr.f32.gmra.mxu0 %v643
    %v645 = vpop.f32.mrf.mxu0
    %v646 = vadd.f32 %v565, %v645
    %v647 = vpop.f32.mrf.mxu0
    %648 = vmatprep.mubr.f32.mxu0 0.0
    %v649 = vand.u32 %v125, 4294901760
    %650 = vmatmul.mubr.f32.gmra.mxu0 %v649
    %v651 = vpop.f32.mrf.mxu0
    %v652 = vadd.f32 %v571, %v651
    %v653 = vpop.f32.mrf.mxu0
    %654 = vdwg.mxu0
    %655 = vst.msk [vmem:[#allocation8] sm:$0xff] %vm120, %v646
    %656 = vst.msk [vmem:[#allocation8 + $0x8] sm:$0xff] %vm120, %v652
    %659 = vrot.lane.b32.xlu0 %v646, 96
    %v660 = vpop.permute.xlu0 %659
    %661 = vrot.lane.b32.xlu0 %v652, 96
    %v662 = vpop.permute.xlu0 %661
    %s665 = scalar_lea.vmem [#allocation8], 16
    %666 = vst.msk [vmem:[%s665] sm:$0xff] %vm120, %v660
    %667 = vst.msk [vmem:[%s665 + $0x8] sm:$0xff] %vm120, %v662
    %668 = vrot.lane.b32.xlu0 %v646, 64
    %v669 = vpop.permute.xlu0 %668
    %670 = vrot.lane.b32.xlu0 %v652, 64
    %v671 = vpop.permute.xlu0 %670
    %s674 = scalar_lea.vmem [#allocation8], 32
    %675 = vst.msk [vmem:[%s674] sm:$0xff] %vm120, %v669
    %676 = vst.msk [vmem:[%s674 + $0x8] sm:$0xff] %vm120, %v671
    // Predicated region
    $region30: #{tpu_custom_call.1} parent=1 // pred_check
      _
    $region31: #{tpu_custom_call.1} parent=1 // pred_check_branch
      %678 = sbr.rel (0) target = $region33
    $region32: #{tpu_custom_call.1} parent=1 // pred_region
      %s680 = ssub.s32 768, 768
      %681 = vsyncadd [#allocation5], %s680
      %s682 = sshll.u32 [#allocation8], 4
      %s683 = int_to_ptr.vmem [resolvable:$true] %s682
      %688 = dma.vmem_to_hbm [thread:$0]  %s683, 768, %s4, [#allocation5], 128, 128, 8
    $region33: #{tpu_custom_call.1} parent=1 // pred_fallthru
      _
    // Predicated region
    $region34: #{tpu_custom_call.1} parent=1 // pred_check
      _
    $region35: #{tpu_custom_call.1} parent=1 // pred_check_branch
      %690 = sbr.rel (0) target = $region37
    $region36: #{tpu_custom_call.1} parent=1 // pred_region
      %691 = dma.done [#allocation5], 768
    $region37: #{tpu_custom_call.1} parent=1 // pred_fallthru
      _
    %692 = vsyncpa [#allocation4], 1
    %693 = vsyncpa [#allocation7], 1
    %694 = vsyncpa [#allocation5], 1

</llo_original>
